<compile_context>
chip_gen: v5e
topology: v5e:2x2
jax: 0.10.0
libtpu: 0.0.40
codegen_flags: <defaults>
</compile_context>

<pallas_src>
import functools

import jax
import jax.numpy as jnp
from jax import lax
from jax.experimental import pallas as pl
from jax.experimental.pallas import tpu as pltpu


def role_net_kernel(x_ref, w_ref, b_ref, o_ref):
    # x: (TB, D), w: (C, D) (PyTorch layout, lane-dense), b: (1, C), o: (TB, C)
    x = x_ref[...]
    w = w_ref[...]
    b = b_ref[...]

    # Linear layer: contract on D for both operands (MXU matmul with
    # transposed RHS), f32 accumulation, then bias broadcast.
    logits = lax.dot_general(
        x, w,
        dimension_numbers=(((1,), (1,)), ((), ())),
        preferred_element_type=jnp.float32,
    ) + b

    # Numerically-stable log-softmax along the class (last / lane) axis.
    m = jnp.max(logits, axis=-1, keepdims=True)
    shifted = logits - m
    lse = jnp.log(jnp.sum(jnp.exp(shifted), axis=-1, keepdims=True))
    o_ref[...] = shifted - lse


def prepare_params(weight, bias):
    """One-time parameter prep: keep weight as-is (no padding), bias -> (1, C)."""
    C = weight.shape[0]
    return weight, bias.reshape(1, C)


@functools.partial(jax.jit, static_argnames=("row_tile",))
def role_net_forward(x, weight, b2d, *, row_tile=256):
    """x: (B, D) f32, weight: (C, D) f32 (PyTorch layout), b2d: (1, C) f32."""
    B, D = x.shape
    C, _ = weight.shape
    out_shape = jax.ShapeDtypeStruct((B, C), jnp.float32)

    if B <= row_tile:
        # Tiny batch: everything fits in one VMEM tile -> gridless call.
        return pl.pallas_call(
            role_net_kernel,
            out_shape=out_shape,
            in_specs=[
                pl.BlockSpec(memory_space=pltpu.MemorySpace.VMEM),  # x
                pl.BlockSpec(memory_space=pltpu.MemorySpace.VMEM),  # weight (C, D)
                pl.BlockSpec(memory_space=pltpu.MemorySpace.VMEM),  # bias (1, C)
            ],
            out_specs=pl.BlockSpec(memory_space=pltpu.MemorySpace.VMEM),
        )(x, weight, b2d)

    # Large batch: 1-D grid over rows; weight/bias stay resident in VMEM.
    # Row axis is independent -> "parallel" (v7x megacore split; harmless on
    # single-TC v5e/v6e).
    return pl.pallas_call(
        role_net_kernel,
        out_shape=out_shape,
        grid=(pl.cdiv(B, row_tile),),
        in_specs=[
            pl.BlockSpec((row_tile, D), lambda i: (i, 0)),   # x rows
            pl.BlockSpec((C, D), lambda i: (0, 0)),          # full weight
            pl.BlockSpec((1, C), lambda i: (0, 0)),          # full bias
        ],
        out_specs=pl.BlockSpec((row_tile, C), lambda i: (i, 0)),
        compiler_params=pltpu.CompilerParams(
            dimension_semantics=("parallel",)),
    )(x, weight, b2d)


def reference_forward(x, weight, bias):
    logits = x @ weight.T + bias
    return jax.nn.log_softmax(logits, axis=-1)


if __name__ == "__main__":
    # RoleNet defaults: input_dim=600, propbank roles -> num_classes=16,
    # transform=False (so forward is just Linear + LogSoftmax).
    D, C = 600, 16

    key = jax.random.PRNGKey(0)
    kx, kw, kb, kx2 = jax.random.split(key, 4)

    # Deterministic parameter init, PyTorch-Linear-style U(-1/sqrt(D), 1/sqrt(D)).
    bound = 1.0 / (D ** 0.5)
    weight = jax.random.uniform(kw, (C, D), minval=-bound, maxval=bound,
                                dtype=jnp.float32)
    bias = jax.random.uniform(kb, (C,), minval=-bound, maxval=bound,
                              dtype=jnp.float32)

    # One-time parameter preparation (hoisted out of the per-call path).
    w, b2d = prepare_params(weight, bias)

    # --- Small batch (fills the 8-sublane vreg dim) -> gridless path. ---
    B_small = 8
    x_small = jax.random.normal(kx, (B_small, D), dtype=jnp.float32)
    out_small = jax.block_until_ready(role_net_forward(x_small, w, b2d))
    ref_small = reference_forward(x_small, weight, bias)
    assert out_small.shape == (B_small, C)
    assert jnp.allclose(out_small, ref_small, atol=1e-5, rtol=1e-5), \
        "gridless path mismatch vs reference"

    # --- Larger batch -> 1-D parallel row grid path. ---
    B_big = 1024
    x_big = jax.random.normal(kx2, (B_big, D), dtype=jnp.float32)
    out_big = jax.block_until_ready(role_net_forward(x_big, w, b2d))
    ref_big = reference_forward(x_big, weight, bias)
    assert out_big.shape == (B_big, C)
    assert jnp.allclose(out_big, ref_big, atol=1e-5, rtol=1e-5), \
        "row-grid path mismatch vs reference"

    # TODO(synk): RoleNet.loss (single-label NLL lookup) is training-time glue,
    # not part of the forward pass, so it is not implemented as a kernel.
    print("KERNEL_OK")
</pallas_src>

<mosaic_0001>
module attributes {stable_mosaic.version = 11 : i64} {
  func.func @role_net_kernel(%arg0: memref<8x600xf32, #tpu.memory_space<vmem>>, %arg1: memref<16x600xf32, #tpu.memory_space<vmem>>, %arg2: memref<1x16xf32, #tpu.memory_space<vmem>>, %arg3: memref<8x16xf32, #tpu.memory_space<vmem>>) attributes {dimension_semantics = [], scalar_prefetch = 0 : i64, scratch_operands = 0 : i64, tpu.core_type = #tpu.core_type<tc>} {
    %c0 = arith.constant 0 : index
    %c0_0 = arith.constant 0 : index
    %0 = vector.load %arg0[%c0, %c0_0] : memref<8x600xf32, #tpu.memory_space<vmem>>, vector<8x600xf32>
    %c0_1 = arith.constant 0 : index
    %c0_2 = arith.constant 0 : index
    %1 = vector.load %arg1[%c0_1, %c0_2] : memref<16x600xf32, #tpu.memory_space<vmem>>, vector<16x600xf32>
    %c0_3 = arith.constant 0 : index
    %c0_4 = arith.constant 0 : index
    %2 = vector.load %arg2[%c0_3, %c0_4] : memref<1x16xf32, #tpu.memory_space<vmem>>, vector<1x16xf32>
    %cst = arith.constant dense<0.000000e+00> : vector<8x16xf32>
    %3 = tpu.matmul %0, %1, %cst {dimension_numbers = #tpu.dot_dimension_numbers<[1], [1], [0], [0], [0, 0, 1, 0], [], []>} : vector<8x600xf32>, vector<16x600xf32>, vector<8x16xf32> -> vector<8x16xf32>
    %4 = vector.broadcast %2 : vector<1x16xf32> to vector<8x16xf32>
    %5 = arith.addf %3, %4 : vector<8x16xf32>
    %cst_5 = arith.constant dense<0xFF800000> : vector<8xf32>
    %6 = vector.multi_reduction <maximumf>, %5, %cst_5 [1] : vector<8x16xf32> to vector<8xf32>
    %7 = vector.shape_cast %6 : vector<8xf32> to vector<8x1xf32>
    %8 = vector.broadcast %7 : vector<8x1xf32> to vector<8x16xf32>
    %9 = arith.subf %5, %8 : vector<8x16xf32>
    %10 = math.exp %9 : vector<8x16xf32>
    %cst_6 = arith.constant dense<0.000000e+00> : vector<8xf32>
    %11 = vector.multi_reduction <add>, %10, %cst_6 [1] : vector<8x16xf32> to vector<8xf32>
    %12 = vector.shape_cast %11 : vector<8xf32> to vector<8x1xf32>
    %13 = math.log %12 : vector<8x1xf32>
    %14 = vector.broadcast %13 : vector<8x1xf32> to vector<8x16xf32>
    %15 = arith.subf %9, %14 : vector<8x16xf32>
    %c0_7 = arith.constant 0 : index
    %c0_8 = arith.constant 0 : index
    %16 = vector.load %arg3[%c0_7, %c0_8] : memref<8x16xf32, #tpu.memory_space<vmem>>, vector<8x16xf32>
    tpu.vector_store %arg3[%c0_7, %c0_8], %15 {strides = array<i32>} : memref<8x16xf32, #tpu.memory_space<vmem>>, vector<8x16xf32>,
    return
  }
}

</mosaic_0001>

<llo_original>
// kernel: role_net_forward.1
$region0: #{role_net_forward.1}
  #allocation0 [shape = 'u32[]', space=smem, size = 0x4, offset = 0x4, fixed_abs, tag = 'smem constant byte address 0x4 - core index']
  #allocation1 [shape = 'u32[72,128]{1,0:T(1,128)}', space=vmem, size = 0x9000, scoped, tag = 'internal scratch']
  %s0 = inlined_call_operand.hbm [shape: f32[8,600], index: 0, kind: input, shape index: {}]
  %s1 = inlined_call_operand.hbm [shape: f32[16,600], index: 1, kind: input, shape index: {}]
  %s2 = inlined_call_operand.vmem [shape: f32[1,16], index: 2, kind: input, shape index: {}]
  %s3 = inlined_call_operand.hbm [shape: f32[8,16], index: 3, kind: output, shape index: {}]
  %s4 = sld [smem:[#allocation0]]
  $region30: #{role_net_forward.1} parent=0
    _
  %s6 = ssub.s32 1, %s4
  %s7 = scalar_select 0, %s6, %s4
  $region1: #{role_net_forward.1} parent=0
    #allocation2 [shape = 'u8[20480]{0}', space=vmem, size = 0x5000, scoped, tag = 'input window, operand 0, single buffered']
    #allocation3 [shape = 's32[1]{0}', space=sflag, size = 0x4, scoped, tag = 'scoped memory for role_net_forward.1']
    #allocation4 [shape = 's32[1]{0}', space=sflag, size = 0x4, scoped, tag = 'scoped memory for role_net_forward.1']
    #allocation5 [shape = 'u8[40960]{0}', space=vmem, size = 0xa000, scoped, tag = 'input window, operand 1, single buffered']
    #allocation6 [shape = 's32[1]{0}', space=sflag, size = 0x4, scoped, tag = 'scoped memory for role_net_forward.1']
    #allocation7 [shape = 'u8[4096]{0}', space=vmem, size = 0x1000, scoped, tag = 'output window, operand 0, single buffered']
    %8 = vsyncpa [#allocation3], 0
    %9 = vsyncpa [#allocation6], 0
    %10 = vsyncpa [#allocation4], 0
    // Predicated region
    $region2: #{role_net_forward.1} parent=1 // pred_check
      _
    $region3: #{role_net_forward.1} parent=1 // pred_check_branch
      %12 = sbr.rel (0) target = $region5
    $region4: #{role_net_forward.1} parent=1 // pred_region
      %14 = vsyncadd [#allocation3], 0
      %s16 = sshll.u32 %s0, 4
      %s17 = int_to_ptr.hbm [resolvable:$true] %s16
      %s18 = sshll.u32 [#allocation2], 4
      %s19 = int_to_ptr.vmem [resolvable:$true] %s18
      %21 = dma.hbm_to_vmem [thread:$0]  %s17, 640, %s19, [#allocation3]
    $region5: #{role_net_forward.1} parent=1 // pred_fallthru
      _
    // Predicated region
    $region6: #{role_net_forward.1} parent=1 // pred_check
      _
    $region7: #{role_net_forward.1} parent=1 // pred_check_branch
      %23 = sbr.rel (0) target = $region9
    $region8: #{role_net_forward.1} parent=1 // pred_region
      %25 = vsyncadd [#allocation6], 0
      %s26 = sshll.u32 %s1, 4
      %s27 = int_to_ptr.hbm [resolvable:$true] %s26
      %s28 = sshll.u32 [#allocation5], 4
      %s29 = int_to_ptr.vmem [resolvable:$true] %s28
      %34 = dma.hbm_to_vmem [thread:$0]  %s27, 1280, %s29, [#allocation6], 640, 640, 40
    $region9: #{role_net_forward.1} parent=1 // pred_fallthru
      _
    // Predicated region
    $region10: #{role_net_forward.1} parent=1 // pred_check
      _
    $region11: #{role_net_forward.1} parent=1 // pred_check_branch
      %36 = sbr.rel (0) target = $region13
    $region12: #{role_net_forward.1} parent=1 // pred_region
      _
    $region13: #{role_net_forward.1} parent=1 // pred_fallthru
      _
    // Predicated region
    $region14: #{role_net_forward.1} parent=1 // pred_check
      _
    $region15: #{role_net_forward.1} parent=1 // pred_check_branch
      %38 = sbr.rel (0) target = $region17
    $region16: #{role_net_forward.1} parent=1 // pred_region
      %40 = dma.done [#allocation3], 640
    $region17: #{role_net_forward.1} parent=1 // pred_fallthru
      _
    // Predicated region
    $region18: #{role_net_forward.1} parent=1 // pred_check
      _
    $region19: #{role_net_forward.1} parent=1 // pred_check_branch
      %42 = sbr.rel (0) target = $region21
    $region20: #{role_net_forward.1} parent=1 // pred_region
      %44 = dma.done [#allocation6], 1280
    $region21: #{role_net_forward.1} parent=1 // pred_fallthru
      _
    %v45 = vld [vmem:[#allocation2] sm:$0xff]
    %v46 = vld [vmem:[#allocation2 + $0x8] sm:$0xff]
    %v47 = vld [vmem:[#allocation2 + $0x10] sm:$0xff]
    %v48 = vld [vmem:[#allocation2 + $0x18] sm:$0xff]
    %v49 = vld [vmem:[#allocation2 + $0x20] sm:$0xff]
    %v50 = vld [vmem:[#allocation5] sm:$0xff]
    %v51 = vld [vmem:[#allocation5 + $0x8] sm:$0xff]
    %v52 = vld [vmem:[#allocation5 + $0x10] sm:$0xff]
    %v53 = vld [vmem:[#allocation5 + $0x18] sm:$0xff]
    %v54 = vld [vmem:[#allocation5 + $0x20] sm:$0xff]
    %v55 = vld [vmem:[#allocation5 + $0x28] sm:$0xff]
    %v56 = vld [vmem:[#allocation5 + $0x30] sm:$0xff]
    %v57 = vld [vmem:[#allocation5 + $0x38] sm:$0xff]
    %v58 = vld [vmem:[#allocation5 + $0x40] sm:$0xff]
    %v59 = vld [vmem:[#allocation5 + $0x48] sm:$0xff]
    %v60 = vld [vmem:[%s2] sm:$0x1]
    %v62 = vperm.slane %v60, 0
    %vm64 = vcmask 719872
    %v66 = vsel %vm64, %v49, 0
    %v69 = vsel %vm64, %v54, 0
    %v72 = vsel %vm64, %v59, 0
    %74 = vmatpush.xpose.msra.mxu0 0.0
    %75 = vmatpush.xpose.msra.mxu0 0.0
    %76 = vmatpush.xpose.msra.mxu0 0.0
    %77 = vmatpush.xpose.msra.mxu0 0.0
    %78 = vmatpush.xpose.msra.mxu0 0.0
    %79 = vmatpush.xpose.msra.mxu0 0.0
    %80 = vmatpush.xpose.msra.mxu0 0.0
    %81 = vmatpush.xpose.msra.mxu0 0.0
    %82 = vmatpush.xpose.msra.mxu0 0.0
    %83 = vmatpush.xpose.msra.mxu0 0.0
    %84 = vmatpush.xpose.msra.mxu0 0.0
    %85 = vmatpush.xpose.msra.mxu0 0.0
    %86 = vmatpush.xpose.msra.mxu0 0.0
    %87 = vmatpush.xpose.msra.mxu0 0.0
    %88 = vmatpush.xpose.msra.mxu0 %v55
    %89 = vmatpush.xpose.msra.mxu0 %v50
    %90 = vmatmul.f32.gmra.mxu0 %v45
    %v91 = vpop.f32.mrf.mxu0
    %v92 = vadd.f32 %v62, %v91
    %93 = vdwg.mxu0
    %94 = vmatpush.xpose.msra.mxu0 0.0
    %95 = vmatpush.xpose.msra.mxu0 0.0
    %96 = vmatpush.xpose.msra.mxu0 0.0
    %97 = vmatpush.xpose.msra.mxu0 0.0
    %98 = vmatpush.xpose.msra.mxu0 0.0
    %99 = vmatpush.xpose.msra.mxu0 0.0
    %100 = vmatpush.xpose.msra.mxu0 0.0
    %101 = vmatpush.xpose.msra.mxu0 0.0
    %102 = vmatpush.xpose.msra.mxu0 0.0
    %103 = vmatpush.xpose.msra.mxu0 0.0
    %104 = vmatpush.xpose.msra.mxu0 0.0
    %105 = vmatpush.xpose.msra.mxu0 0.0
    %106 = vmatpush.xpose.msra.mxu0 0.0
    %107 = vmatpush.xpose.msra.mxu0 0.0
    %108 = vmatpush.xpose.msra.mxu0 %v56
    %109 = vmatpush.xpose.msra.mxu0 %v51
    %110 = vmatmul.f32.gmra.mxu0 %v46
    %v111 = vpop.f32.mrf.mxu0
    %v112 = vadd.f32 %v92, %v111
    %113 = vdwg.mxu0
    %114 = vmatpush.xpose.msra.mxu0 0.0
    %115 = vmatpush.xpose.msra.mxu0 0.0
    %116 = vmatpush.xpose.msra.mxu0 0.0
    %117 = vmatpush.xpose.msra.mxu0 0.0
    %118 = vmatpush.xpose.msra.mxu0 0.0
    %119 = vmatpush.xpose.msra.mxu0 0.0
    %120 = vmatpush.xpose.msra.mxu0 0.0
    %121 = vmatpush.xpose.msra.mxu0 0.0
    %122 = vmatpush.xpose.msra.mxu0 0.0
    %123 = vmatpush.xpose.msra.mxu0 0.0
    %124 = vmatpush.xpose.msra.mxu0 0.0
    %125 = vmatpush.xpose.msra.mxu0 0.0
    %126 = vmatpush.xpose.msra.mxu0 0.0
    %127 = vmatpush.xpose.msra.mxu0 0.0
    %128 = vmatpush.xpose.msra.mxu0 %v57
    %129 = vmatpush.xpose.msra.mxu0 %v52
    %130 = vmatmul.f32.gmra.mxu0 %v47
    %v131 = vpop.f32.mrf.mxu0
    %v132 = vadd.f32 %v112, %v131
    %133 = vdwg.mxu0
    %134 = vmatpush.xpose.msra.mxu0 0.0
    %135 = vmatpush.xpose.msra.mxu0 0.0
    %136 = vmatpush.xpose.msra.mxu0 0.0
    %137 = vmatpush.xpose.msra.mxu0 0.0
    %138 = vmatpush.xpose.msra.mxu0 0.0
    %139 = vmatpush.xpose.msra.mxu0 0.0
    %140 = vmatpush.xpose.msra.mxu0 0.0
    %141 = vmatpush.xpose.msra.mxu0 0.0
    %142 = vmatpush.xpose.msra.mxu0 0.0
    %143 = vmatpush.xpose.msra.mxu0 0.0
    %144 = vmatpush.xpose.msra.mxu0 0.0
    %145 = vmatpush.xpose.msra.mxu0 0.0
    %146 = vmatpush.xpose.msra.mxu0 0.0
    %147 = vmatpush.xpose.msra.mxu0 0.0
    %148 = vmatpush.xpose.msra.mxu0 %v58
    %149 = vmatpush.xpose.msra.mxu0 %v53
    %150 = vmatmul.f32.gmra.mxu0 %v48
    %v151 = vpop.f32.mrf.mxu0
    %v152 = vadd.f32 %v132, %v151
    %153 = vdwg.mxu0
    %154 = vmatpush.xpose.msra.mxu0 0.0
    %155 = vmatpush.xpose.msra.mxu0 0.0
    %156 = vmatpush.xpose.msra.mxu0 0.0
    %157 = vmatpush.xpose.msra.mxu0 0.0
    %158 = vmatpush.xpose.msra.mxu0 0.0
    %159 = vmatpush.xpose.msra.mxu0 0.0
    %160 = vmatpush.xpose.msra.mxu0 0.0
    %161 = vmatpush.xpose.msra.mxu0 0.0
    %162 = vmatpush.xpose.msra.mxu0 0.0
    %163 = vmatpush.xpose.msra.mxu0 0.0
    %164 = vmatpush.xpose.msra.mxu0 0.0
    %165 = vmatpush.xpose.msra.mxu0 0.0
    %166 = vmatpush.xpose.msra.mxu0 0.0
    %167 = vmatpush.xpose.msra.mxu0 0.0
    %168 = vmatpush.xpose.msra.mxu0 %v72
    %169 = vmatpush.xpose.msra.mxu0 %v69
    %170 = vmatmul.f32.gmra.mxu0 %v66
    %v171 = vpop.f32.mrf.mxu0
    %v172 = vadd.f32 %v152, %v171
    %173 = vdwg.mxu0
    %vm174 = vcmask 130048
    %v175 = vsel %vm174, %v172, -inf
    %176 = vmax.xlane.f32.xlu0 %v175
    %v177 = vpop.xlane.xlu0 %176
    %v178 = vsub.f32 %v172, %v177
    %v179 = vmul.f32 %v178, 1.442695
    %v180 = vpow.pop %v179
    %v181 = vsel %vm174, %v180, 0.0
    %182 = vadd.xlane.f32.xlu0 %v181
    %v183 = vpop.xlane.xlu0 %182
    %v184 = vlog2.pop %v183
    %v185 = vmul.f32 %v184, 0.6931472
    %v186 = vsub.f32 %v178, %v185
    %187 = vst.msk [vmem:[#allocation7] sm:$0xff] %vm174, %v186
    // Predicated region
    $region22: #{role_net_forward.1} parent=1 // pred_check
      _
    $region23: #{role_net_forward.1} parent=1 // pred_check_branch
      %189 = sbr.rel (0) target = $region25
    $region24: #{role_net_forward.1} parent=1 // pred_region
      %191 = vsyncadd [#allocation4], 0
      %s193 = sshll.u32 [#allocation7], 4
      %s194 = int_to_ptr.vmem [resolvable:$true] %s193
      %s195 = sshll.u32 %s3, 4
      %s196 = int_to_ptr.hbm [resolvable:$true] %s195
      %198 = dma.vmem_to_hbm [thread:$0]  %s194, 128, %s196, [#allocation4]
    $region25: #{role_net_forward.1} parent=1 // pred_fallthru
      _
    // Predicated region
    $region26: #{role_net_forward.1} parent=1 // pred_check
      _
    $region27: #{role_net_forward.1} parent=1 // pred_check_branch
      %200 = sbr.rel (0) target = $region29
    $region28: #{role_net_forward.1} parent=1 // pred_region
      %202 = dma.done [#allocation4], 128
    $region29: #{role_net_forward.1} parent=1 // pred_fallthru
      _
    %203 = vsyncpa [#allocation3], 1
    %204 = vsyncpa [#allocation6], 1
    %205 = vsyncpa [#allocation4], 1

</llo_original>
